<compile_context>
chip_gen: v6e
topology: v6e:2x2x1
jax: 0.10.0
libtpu: 0.0.40
codegen_flags: <defaults>
</compile_context>

<pallas_src>
import jax
import jax.numpy as jnp
from jax.experimental import pallas as pl
from jax.experimental.pallas import tpu as pltpu

LANES = 128


def _round_up(v, m):
    return ((v + m - 1) // m) * m


def pn_kernel(coef_ref, xy_ref, out_ref):
    # coef_ref : SMEM (6,) f32      -- [a, b, d, e, f, c]
    # xy_ref   : VMEM (2, rt, 128)  -- packed [x; y] features, batch on lanes
    # out_ref  : VMEM (rt, 128)     -- z^T W z per sample (lane-dense store)
    a = coef_ref[0]
    b = coef_ref[1]
    d = coef_ref[2]
    e = coef_ref[3]
    f = coef_ref[4]
    c = coef_ref[5]
    xv = xy_ref[0].astype(jnp.float32)
    yv = xy_ref[1].astype(jnp.float32)
    # z^T W z = a*x^2 + b*y^2 + d*x*y + e*x + f*y + c   (pure VPU FMAs)
    res = xv * (a * xv + d * yv + e) + yv * (b * yv + f) + c
    out_ref[...] = res.astype(out_ref.dtype)


def _fold_coeffs(W):
    # z^T W z with z = [x, y, 1] expands to
    #   W00 x^2 + W11 y^2 + (W01+W10) xy + (W02+W20) x + (W12+W21) y + W22
    Wf = W.astype(jnp.float32)
    return jnp.stack([
        Wf[0, 0],                 # a : x^2
        Wf[1, 1],                 # b : y^2
        Wf[0, 1] + Wf[1, 0],      # d : x*y
        Wf[0, 2] + Wf[2, 0],      # e : x
        Wf[1, 2] + Wf[2, 1],      # f : y
        Wf[2, 2],                 # c : 1
    ])                            # (6,) f32


def polynomial_net_forward(x, W, *, row_tile=4096, min_pallas_batch=1 << 17,
                           force_pallas=False):
    """x: (B, 2), W: (3, 3)  ->  (B, 1), matching the torch forward."""
    B = x.shape[0]
    dtype = x.dtype
    coeffs = _fold_coeffs(W)

    # Small-batch bypass: launch/pad overhead dominates; XLA's fused
    # elementwise matches or beats the kernel and avoids per-shape recompiles.
    if B < min_pallas_batch and not force_pallas:
        xf = x[:, 0].astype(jnp.float32)
        yf = x[:, 1].astype(jnp.float32)
        a, b, d, e, f, c = (coeffs[i] for i in range(6))
        res = xf * (a * xf + d * yf + e) + yf * (b * yf + f) + c
        return res.astype(dtype).reshape(B, 1)

    # ---- tile sizing --------------------------------------------------------
    rows = pl.cdiv(B, LANES)          # batch rows of 128 lanes each
    rt = row_tile
    if rows <= rt:
        if rows > 64:
            # mid-size batch: keep >=2 tiles so both v7x TensorCores get work
            rt = _round_up(pl.cdiv(rows, 2), 8)
        else:
            rt = max(8, _round_up(rows, 8))
    rows_p = _round_up(rows, rt)
    Bp = rows_p * LANES

    # Single repack: one pad + transpose into a (2, rows_p, 128) slab instead
    # of two strided x[:, i] passes (halves wrapper-side HBM traffic).
    # TODO(synk): if the producer can hand us x as (2, B) this repack vanishes.
    xy = jnp.pad(x.T, ((0, 0), (0, Bp - B))).reshape(2, rows_p, LANES)

    # VMEM budget: double-buffered input block (2*rt*128) + output block
    # (rt*128) plus headroom; v5e's 16 MiB scoped default is too small at
    # rt>=4096, so raise it explicitly (clamped under v7x's 64 MiB physical).
    itemsize = jnp.dtype(dtype).itemsize
    block_bytes = (2 * rt * LANES + rt * LANES) * itemsize
    vmem_limit = int(min(max(2 * block_bytes + (8 << 20), 32 << 20), 56 << 20))

    out_slab = pl.pallas_call(
        pn_kernel,
        out_shape=jax.ShapeDtypeStruct((rows_p, LANES), dtype),
        grid_spec=pltpu.PrefetchScalarGridSpec(
            num_scalar_prefetch=0,
            grid=(rows_p // rt,),
            in_specs=[
                pl.BlockSpec(memory_space=pltpu.MemorySpace.SMEM),   # 6 coeffs
                pl.BlockSpec((2, rt, LANES), lambda i: (0, i, 0)),   # [x; y]
            ],
            out_specs=pl.BlockSpec((rt, LANES), lambda i: (i, 0)),
        ),
        compiler_params=pltpu.CompilerParams(
            dimension_semantics=("parallel",),   # shard batch tiles across TCs
            vmem_limit_bytes=vmem_limit,
        ),
    )(coeffs, xy)

    # Epilogue slice; kept inside the caller's jit it fuses with the consumer.
    return out_slab.reshape(Bp)[:B].reshape(B, 1)


def reference_forward(x, W):
    """Pure-JAX reference mirroring the torch module exactly."""
    B = x.shape[0]
    z = jnp.concatenate([x, jnp.ones((B, 1), dtype=x.dtype)], axis=1)  # (B, 3)
    return jnp.einsum("bi,ij,bj->b", z, W, z)[:, None]                 # (B, 1)


if __name__ == "__main__":
    key = jax.random.PRNGKey(0)
    k_x, k_w = jax.random.split(key)

    W = jax.random.normal(k_w, (3, 3), dtype=jnp.float32)  # torch.randn(3, 3)

    # 1) small batch, forced through the Pallas path (single tile)
    B = 16
    x = jax.random.normal(k_x, (B, 2), dtype=jnp.float32)
    out = jax.block_until_ready(polynomial_net_forward(x, W, force_pallas=True))
    ref = reference_forward(x, W)
    assert out.shape == (B, 1) and out.dtype == jnp.float32
    assert jnp.allclose(out, ref, rtol=1e-5, atol=1e-5), (out, ref)

    # 2) non-multiple-of-128 batch (exercises the padded tail)
    B2 = 300
    x2 = jax.random.normal(k_x, (B2, 2), dtype=jnp.float32)
    out2 = jax.block_until_ready(polynomial_net_forward(x2, W, force_pallas=True))
    assert jnp.allclose(out2, reference_forward(x2, W), rtol=1e-5, atol=1e-5)

    # 3) mid-size batch (exercises the >=2-tile grid split)
    B3 = 9000
    x3 = jax.random.normal(k_x, (B3, 2), dtype=jnp.float32)
    out3 = jax.block_until_ready(polynomial_net_forward(x3, W, force_pallas=True))
    assert jnp.allclose(out3, reference_forward(x3, W), rtol=1e-5, atol=1e-4)

    # 4) default dispatch (small-batch pure-JAX bypass)
    out4 = jax.block_until_ready(polynomial_net_forward(x, W))
    assert jnp.allclose(out4, ref, rtol=1e-5, atol=1e-5)

    print("KERNEL_OK")
</pallas_src>

<mosaic_0001>
module attributes {stable_mosaic.version = 11 : i64} {
  func.func @pn_kernel(%arg0: i32, %arg1: memref<6xf32, #tpu.memory_space<smem>>, %arg2: memref<2x8x128xf32, #tpu.memory_space<vmem>>, %arg3: memref<8x128xf32, #tpu.memory_space<vmem>>) attributes {dimension_semantics = [#tpu.dimension_semantics<parallel>], iteration_bounds = array<i64: 1>, scalar_prefetch = 0 : i64, scratch_operands = 0 : i64, tpu.core_type = #tpu.core_type<tc>, window_params = [{transform_indices = @transform_0, window_bounds = array<i64: 6>}, {transform_indices = @transform_1, window_bounds = array<i64: 2, 8, 128>}, {transform_indices = @transform_2, window_bounds = array<i64: 8, 128>}]} {
    %c0 = arith.constant 0 : index
    %0 = memref.load %arg1[%c0] : memref<6xf32, #tpu.memory_space<smem>>
    %c1 = arith.constant 1 : index
    %1 = memref.load %arg1[%c1] : memref<6xf32, #tpu.memory_space<smem>>
    %c2 = arith.constant 2 : index
    %2 = memref.load %arg1[%c2] : memref<6xf32, #tpu.memory_space<smem>>
    %c3 = arith.constant 3 : index
    %3 = memref.load %arg1[%c3] : memref<6xf32, #tpu.memory_space<smem>>
    %c4 = arith.constant 4 : index
    %4 = memref.load %arg1[%c4] : memref<6xf32, #tpu.memory_space<smem>>
    %c5 = arith.constant 5 : index
    %5 = memref.load %arg1[%c5] : memref<6xf32, #tpu.memory_space<smem>>
    %c0_0 = arith.constant 0 : index
    %c0_1 = arith.constant 0 : index
    %c0_2 = arith.constant 0 : index
    %6 = vector.load %arg2[%c0_0, %c0_1, %c0_2] : memref<2x8x128xf32, #tpu.memory_space<vmem>>, vector<1x8x128xf32>
    %7 = vector.shape_cast %6 : vector<1x8x128xf32> to vector<8x128xf32>
    %c1_3 = arith.constant 1 : index
    %c0_4 = arith.constant 0 : index
    %c0_5 = arith.constant 0 : index
    %8 = vector.load %arg2[%c1_3, %c0_4, %c0_5] : memref<2x8x128xf32, #tpu.memory_space<vmem>>, vector<1x8x128xf32>
    %9 = vector.shape_cast %8 : vector<1x8x128xf32> to vector<8x128xf32>
    %10 = vector.broadcast %0 : f32 to vector<8x128xf32>
    %11 = arith.mulf %10, %7 : vector<8x128xf32>
    %12 = vector.broadcast %2 : f32 to vector<8x128xf32>
    %13 = arith.mulf %12, %9 : vector<8x128xf32>
    %14 = arith.addf %11, %13 : vector<8x128xf32>
    %15 = vector.broadcast %3 : f32 to vector<8x128xf32>
    %16 = arith.addf %14, %15 : vector<8x128xf32>
    %17 = arith.mulf %7, %16 : vector<8x128xf32>
    %18 = vector.broadcast %1 : f32 to vector<8x128xf32>
    %19 = arith.mulf %18, %9 : vector<8x128xf32>
    %20 = vector.broadcast %4 : f32 to vector<8x128xf32>
    %21 = arith.addf %19, %20 : vector<8x128xf32>
    %22 = arith.mulf %9, %21 : vector<8x128xf32>
    %23 = arith.addf %17, %22 : vector<8x128xf32>
    %24 = vector.broadcast %5 : f32 to vector<8x128xf32>
    %25 = arith.addf %23, %24 : vector<8x128xf32>
    %c0_6 = arith.constant 0 : index
    %c0_7 = arith.constant 0 : index
    %26 = vector.load %arg3[%c0_6, %c0_7] : memref<8x128xf32, #tpu.memory_space<vmem>>, vector<8x128xf32>
    tpu.vector_store %arg3[%c0_6, %c0_7], %25 {strides = array<i32>} : memref<8x128xf32, #tpu.memory_space<vmem>>, vector<8x128xf32>,
    return
  }
  func.func @transform_0(%arg0: i32) -> i32 {
    %c0_i32 = arith.constant 0 : i32
    %c0_i32_0 = arith.constant 0 : i32
    return %c0_i32 : i32
  }
  func.func @transform_1(%arg0: i32) -> (i32, i32, i32) {
    %c0_i32 = arith.constant 0 : i32
    %c0_i32_0 = arith.constant 0 : i32
    %c0_i32_1 = arith.constant 0 : i32
    return %c0_i32, %arg0, %c0_i32_0 : i32, i32, i32
  }
  func.func @transform_2(%arg0: i32) -> (i32, i32) {
    %c0_i32 = arith.constant 0 : i32
    %c0_i32_0 = arith.constant 0 : i32
    return %arg0, %c0_i32 : i32, i32
  }
}

</mosaic_0001>

<llo_original>
// kernel: tpu_custom_call.1
$region0: #{tpu_custom_call.1}
  #allocation0 [shape = 'u32[]', space=smem, size = 0x4, offset = 0x4, fixed_abs, tag = 'smem constant byte address 0x4 - core index']
  #allocation1 [shape = 'u32[144,128]{1,0:T(1,128)}', space=vmem, size = 0x12000, scoped, tag = 'internal scratch']
  %s0 = inlined_call_operand.hbm [shape: f32[6], index: 0, kind: input, shape index: {}]
  %s1 = inlined_call_operand.hbm [shape: f32[2,8,128], index: 1, kind: input, shape index: {}]
  %s2 = inlined_call_operand.hbm [shape: f32[8,128], index: 2, kind: output, shape index: {}]
  %s3 = sld [smem:[#allocation0]]
  $region26: #{tpu_custom_call.1} parent=0
    _
  %s5 = ssub.s32 1, %s3
  %s6 = scalar_select 0, %s5, %s3
  $region1: #{tpu_custom_call.1} parent=0
    #allocation2 [shape = 'u8[512]{0}', space=smem, size = 0x200, scoped, tag = 'input window, operand 0, single buffered']
    #allocation3 [shape = 's32[1]{0}', space=sflag, size = 0x4, scoped, tag = 'scoped memory for tpu_custom_call.1']
    #allocation4 [shape = 's32[1]{0}', space=sflag, size = 0x4, scoped, tag = 'scoped memory for tpu_custom_call.1']
    #allocation5 [shape = 's32[1]{0}', space=sflag, size = 0x4, scoped, tag = 'scoped memory for tpu_custom_call.1']
    #allocation6 [shape = 'u8[8192]{0}', space=vmem, size = 0x2000, scoped, tag = 'input window, operand 1, single buffered']
    #allocation7 [shape = 'u8[4096]{0}', space=vmem, size = 0x1000, scoped, tag = 'output window, operand 0, single buffered']
    %7 = vsyncpa [#allocation5], 0
    %8 = vsyncpa [#allocation3], 0
    %9 = vsyncpa [#allocation4], 0
    // Predicated region
    $region2: #{tpu_custom_call.1} parent=1 // pred_check
      _
    $region3: #{tpu_custom_call.1} parent=1 // pred_check_branch
      %11 = sbr.rel (0) target = $region5
    $region4: #{tpu_custom_call.1} parent=1 // pred_region
      %s13 = ssub.s32 16, 16
      %14 = vsyncadd [#allocation5], %s13
      %17 = dma.hbm_to_smem %s0, 16, [#allocation2], [#allocation5]
    $region5: #{tpu_custom_call.1} parent=1 // pred_fallthru
      _
    // Predicated region
    $region6: #{tpu_custom_call.1} parent=1 // pred_check
      _
    $region7: #{tpu_custom_call.1} parent=1 // pred_check_branch
      %19 = sbr.rel (0) target = $region9
    $region8: #{tpu_custom_call.1} parent=1 // pred_region
      %s21 = ssub.s32 256, 256
      %22 = vsyncadd [#allocation3], %s21
      %s23 = sshll.u32 [#allocation6], 4
      %s24 = int_to_ptr.vmem [resolvable:$true] %s23
      %29 = dma.hbm_to_vmem [thread:$0]  %s1, 256, %s24, [#allocation3], 128, 128, 8
    $region9: #{tpu_custom_call.1} parent=1 // pred_fallthru
      _
    // Predicated region
    $region10: #{tpu_custom_call.1} parent=1 // pred_check
      _
    $region11: #{tpu_custom_call.1} parent=1 // pred_check_branch
      %31 = sbr.rel (0) target = $region13
    $region12: #{tpu_custom_call.1} parent=1 // pred_region
      %32 = dma.done [#allocation5], 16
    $region13: #{tpu_custom_call.1} parent=1 // pred_fallthru
      _
    // Predicated region
    $region14: #{tpu_custom_call.1} parent=1 // pred_check
      _
    $region15: #{tpu_custom_call.1} parent=1 // pred_check_branch
      %34 = sbr.rel (0) target = $region17
    $region16: #{tpu_custom_call.1} parent=1 // pred_region
      %35 = dma.done [#allocation3], 256
    $region17: #{tpu_custom_call.1} parent=1 // pred_fallthru
      _
    %36 = sfence
    %s37 = sld [smem:[#allocation2]]
    %s38 = sld [smem:[#allocation2 + $0x1]]
    %s39 = sld [smem:[#allocation2 + $0x2]]
    %s40 = sld [smem:[#allocation2 + $0x3]]
    %s41 = sld [smem:[#allocation2 + $0x4]]
    %s42 = sld [smem:[#allocation2 + $0x5]]
    %v43 = vld [vmem:[#allocation6] sm:$0xff]
    %s44 = scalar_lea.vmem [#allocation6], 8
    %v45 = vld [vmem:[%s44] sm:$0xff]
    %v46 = vstv %s37
    %v47 = vmul.f32 %v46, %v43
    %v48 = vstv %s39
    %v49 = vmul.f32 %v48, %v45
    %v50 = vadd.f32 %v47, %v49
    %v51 = vstv %s40
    %v52 = vadd.f32 %v50, %v51
    %v53 = vmul.f32 %v43, %v52
    %v54 = vstv %s38
    %v55 = vmul.f32 %v54, %v45
    %v56 = vstv %s41
    %v57 = vadd.f32 %v55, %v56
    %v58 = vmul.f32 %v45, %v57
    %v59 = vadd.f32 %v53, %v58
    %v60 = vstv %s42
    %v61 = vadd.f32 %v59, %v60
    %62 = vst [vmem:[#allocation7] sm:$0xff] %v61
    // Predicated region
    $region18: #{tpu_custom_call.1} parent=1 // pred_check
      _
    $region19: #{tpu_custom_call.1} parent=1 // pred_check_branch
      %64 = sbr.rel (0) target = $region21
    $region20: #{tpu_custom_call.1} parent=1 // pred_region
      %s66 = ssub.s32 128, 128
      %67 = vsyncadd [#allocation4], %s66
      %s69 = sshll.u32 [#allocation7], 4
      %s70 = int_to_ptr.vmem [resolvable:$true] %s69
      %72 = dma.vmem_to_hbm [thread:$0]  %s70, 128, %s2, [#allocation4]
    $region21: #{tpu_custom_call.1} parent=1 // pred_fallthru
      _
    // Predicated region
    $region22: #{tpu_custom_call.1} parent=1 // pred_check
      _
    $region23: #{tpu_custom_call.1} parent=1 // pred_check_branch
      %74 = sbr.rel (0) target = $region25
    $region24: #{tpu_custom_call.1} parent=1 // pred_region
      %75 = dma.done [#allocation4], 128
    $region25: #{tpu_custom_call.1} parent=1 // pred_fallthru
      _
    %76 = vsyncpa [#allocation3], 1
    %77 = vsyncpa [#allocation4], 1
    %78 = vsyncpa [#allocation5], 1

</llo_original>
